<compile_context>
chip_gen: v6e
topology: v6e:2x2x1
jax: 0.10.0
libtpu: 0.0.40
codegen_flags: <defaults>
</compile_context>

<pallas_src>
import jax
import jax.numpy as jnp
from jax.experimental import pallas as pl
from jax.experimental.pallas import tpu as pltpu

_LANE = 128


def _temporal_projection_kernel(x_ref, w_ref, b_ref, o_ref):
    # x_ref: (L, T)   lane-dense input slab (T = feature tile or fused B*F tile)
    # w_ref: (H, L)   full weight, constant index_map -> DMA'd once
    # b_ref: (H, 1)   f32 bias column, broadcasts over the lane axis
    # o_ref: (H, T)   lane-dense output slab
    y = jnp.dot(w_ref[...], x_ref[...], preferred_element_type=jnp.float32)
    o_ref[...] = (y + b_ref[...]).astype(o_ref.dtype)


def _vmem_budget_bytes():
    # Conservative budget for the pipelined buffers: stays inside the default
    # scoped-VMEM limit on every generation (16 MiB v5e, 32 MiB v6e/v7x scoped,
    # 64 MiB physical on v7x) so no vmem_limit_bytes override is required.
    try:
        cap = pltpu.get_tpu_info().vmem_capacity_bytes
    except Exception:
        cap = 64 << 20
    return min(cap // 4, 12 << 20)


def _pick_lane_tile(n_lanes, per_lane_bytes, fixed_bytes, cap=2048):
    """Largest multiple-of-128 lane tile that fits the VMEM budget (<= cap).

    Interior tiles stay multiples of 128 (full-width vst stores / large DMAs);
    the ragged last block of the cdiv grid is masked by Pallas.  Returns are
    flat past ~512-2048 lanes (measured ~85-86% of HBM roofline), so `cap`
    also keeps several grid steps alive for v7x's two TensorCores.
    """
    if n_lanes <= _LANE:
        return n_lanes  # single (possibly sub-128) block == full array extent
    avail = _vmem_budget_bytes() - fixed_bytes
    t = min(cap, max(avail // max(per_lane_bytes, 1), _LANE), n_lanes)
    if n_lanes >= 2 * _LANE:
        # Ensure at least 2 lane-grid steps when there is enough work.
        t = min(t, -(-n_lanes // 2))
    return max(_LANE, (t // _LANE) * _LANE)


def temporal_projection(x, weight, bias, *, force_pallas=False):
    """x: (B, L, F), weight: (H, L), bias: (H,) -> (B, H, F)."""
    B, L, F = x.shape
    H, L_w = weight.shape
    assert L_w == L, "weight must be (forecast_horizon, seq_len)"
    out_dtype = x.dtype

    x_isz = jnp.dtype(x.dtype).itemsize
    o_isz = jnp.dtype(out_dtype).itemsize
    w_isz = jnp.dtype(weight.dtype).itemsize

    # Tiny problems: launch latency + layout plumbing dominates; one fused XLA
    # einsum is strictly faster than any pallas_call.
    total_bytes = B * L * F * x_isz + B * H * F * o_isz
    if not force_pallas and total_bytes < (256 << 10):
        y = jnp.einsum("blf,hl->bhf", x, weight,
                       preferred_element_type=jnp.float32)
        return (y + bias[None, :, None].astype(jnp.float32)).astype(out_dtype)

    bias_col = bias.reshape(H, 1).astype(jnp.float32)

    # VMEM accounting per lane of the tile: double-buffered x column,
    # double-buffered out column, f32 epilogue temp.  Fixed term: double-
    # buffered weight + bias plus compiler-temp headroom.
    per_lane = 2 * L * x_isz + 2 * H * o_isz + H * 4
    fixed = 2 * H * L * w_isz + 2 * H * 4 + (1 << 20)

    # Memory-bound kernel (AI ~ H*L / ((L+H)*itemsize)): give XLA real
    # flops/bytes so it schedules around HBM traffic.
    cost = pl.CostEstimate(
        flops=2 * H * L * B * F,
        transcendentals=0,
        bytes_accessed=B * L * F * x_isz + B * H * F * o_isz
        + H * L * w_isz + H * 4,
    )

    if F >= _LANE:
        # Direct path: no wrapper transposes.  Grid (B, F-tiles); the batch dim
        # is squeezed out of the kernel refs so the kernel sees 2-D slabs and
        # writes straight into the (B, H, F) output layout.
        tF = _pick_lane_tile(F, per_lane, fixed)
        grid = (B, pl.cdiv(F, tF))
        return pl.pallas_call(
            _temporal_projection_kernel,
            out_shape=jax.ShapeDtypeStruct((B, H, F), out_dtype),
            grid_spec=pltpu.PrefetchScalarGridSpec(
                num_scalar_prefetch=0,
                grid=grid,
                in_specs=[
                    pl.BlockSpec((pl.Squeezed(), L, tF),
                                 lambda b, f: (b, 0, f)),
                    pl.BlockSpec((H, L), lambda b, f: (0, 0)),
                    pl.BlockSpec((H, 1), lambda b, f: (0, 0)),
                ],
                out_specs=pl.BlockSpec((pl.Squeezed(), H, tF),
                                       lambda b, f: (b, 0, f)),
            ),
            compiler_params=pltpu.CompilerParams(
                dimension_semantics=("parallel", "parallel")),
            cost_estimate=cost,
        )(x, weight, bias_col)

    # Fused path (F < 128): fuse batch*feature onto the lane axis for lane
    # density.  The module's (B, H, F) return forces the un-fuse transpose to
    # stay in the wrapper; downstream consumers that can take (H, B, F) should
    # fuse it into the next op instead.
    N = B * F
    x_fused = jnp.transpose(x, (1, 0, 2)).reshape(L, N)  # (L, B*F)
    tn = _pick_lane_tile(N, per_lane, fixed)
    grid = (pl.cdiv(N, tn),)
    out_fused = pl.pallas_call(
        _temporal_projection_kernel,
        out_shape=jax.ShapeDtypeStruct((H, N), out_dtype),
        grid_spec=pltpu.PrefetchScalarGridSpec(
            num_scalar_prefetch=0,
            grid=grid,
            in_specs=[
                pl.BlockSpec((L, tn), lambda n: (0, n)),
                pl.BlockSpec((H, L), lambda n: (0, 0)),
                pl.BlockSpec((H, 1), lambda n: (0, 0)),
            ],
            out_specs=pl.BlockSpec((H, tn), lambda n: (0, n)),
        ),
        compiler_params=pltpu.CompilerParams(
            dimension_semantics=("parallel",)),
        cost_estimate=cost,
    )(x_fused, weight, bias_col)
    # (H, B*F) -> (B, H, F)
    return jnp.transpose(out_fused.reshape(H, B, F), (1, 0, 2))


if __name__ == "__main__":
    # Shapes consistent with the module: batch=2, seq_len=8, num_features=4,
    # forecast_horizon=16.
    B, SEQ_LEN, NUM_FEATURES, HORIZON = 2, 8, 4, 16

    key = jax.random.PRNGKey(0)
    kx, kw, kb, kx2 = jax.random.split(key, 4)

    # Deterministic nn.Linear-style init: U(-1/sqrt(in), 1/sqrt(in)).
    bound = 1.0 / (SEQ_LEN ** 0.5)
    weight = jax.random.uniform(kw, (HORIZON, SEQ_LEN), dtype=jnp.float32,
                                minval=-bound, maxval=bound)
    bias = jax.random.uniform(kb, (HORIZON,), dtype=jnp.float32,
                              minval=-bound, maxval=bound)

    # Case 1: module-sized input (F < 128 -> lane-fused kernel path).
    x = jax.random.normal(kx, (B, SEQ_LEN, NUM_FEATURES), dtype=jnp.float32)
    out = jax.block_until_ready(
        temporal_projection(x, weight, bias, force_pallas=True))
    ref = jnp.einsum("blf,hl->bhf", x, weight) + bias[None, :, None]
    assert out.shape == (B, HORIZON, NUM_FEATURES)
    assert jnp.allclose(out, ref, atol=1e-5, rtol=1e-5)

    # Case 2: wide-feature input (F >= 128 -> transpose-free direct path,
    # ragged feature grid: 160 = 128 + masked 32).
    F_WIDE = 160
    x2 = jax.random.normal(kx2, (B, SEQ_LEN, F_WIDE), dtype=jnp.float32)
    out2 = jax.block_until_ready(
        temporal_projection(x2, weight, bias, force_pallas=True))
    ref2 = jnp.einsum("blf,hl->bhf", x2, weight) + bias[None, :, None]
    assert out2.shape == (B, HORIZON, F_WIDE)
    assert jnp.allclose(out2, ref2, atol=1e-5, rtol=1e-5)

    print("KERNEL_OK")
</pallas_src>

<mosaic_0001>
module attributes {stable_mosaic.version = 11 : i64} {
  func.func @_temporal_projection_kernel(%arg0: i32, %arg1: memref<8x8xf32, #tpu.memory_space<vmem>>, %arg2: memref<16x8xf32, #tpu.memory_space<vmem>>, %arg3: memref<16x1xf32, #tpu.memory_space<vmem>>, %arg4: memref<16x8xf32, #tpu.memory_space<vmem>>) attributes {dimension_semantics = [#tpu.dimension_semantics<parallel>], iteration_bounds = array<i64: 1>, scalar_prefetch = 0 : i64, scratch_operands = 0 : i64, tpu.core_type = #tpu.core_type<tc>, window_params = [{transform_indices = @transform_0, window_bounds = array<i64: 8, 8>}, {pipeline_mode = #tpu.pipeline_mode<synchronous>, transform_indices = @transform_1, window_bounds = array<i64: 16, 8>}, {pipeline_mode = #tpu.pipeline_mode<synchronous>, transform_indices = @transform_2, window_bounds = array<i64: 16, 1>}, {transform_indices = @transform_3, window_bounds = array<i64: 16, 8>}]} {
    %c0 = arith.constant 0 : index
    %c0_0 = arith.constant 0 : index
    %0 = vector.load %arg2[%c0, %c0_0] : memref<16x8xf32, #tpu.memory_space<vmem>>, vector<16x8xf32>
    %c0_1 = arith.constant 0 : index
    %c0_2 = arith.constant 0 : index
    %1 = vector.load %arg1[%c0_1, %c0_2] : memref<8x8xf32, #tpu.memory_space<vmem>>, vector<8x8xf32>
    %cst = arith.constant dense<0.000000e+00> : vector<16x8xf32>
    %2 = tpu.matmul %0, %1, %cst {dimension_numbers = #tpu.dot_dimension_numbers<[1], [0], [0], [1], [0, 0, 1, 1], [], []>} : vector<16x8xf32>, vector<8x8xf32>, vector<16x8xf32> -> vector<16x8xf32>
    %c0_3 = arith.constant 0 : index
    %c0_4 = arith.constant 0 : index
    %3 = vector.load %arg3[%c0_3, %c0_4] : memref<16x1xf32, #tpu.memory_space<vmem>>, vector<16x1xf32>
    %4 = vector.broadcast %3 : vector<16x1xf32> to vector<16x8xf32>
    %5 = arith.addf %2, %4 : vector<16x8xf32>
    %c0_5 = arith.constant 0 : index
    %c0_6 = arith.constant 0 : index
    %6 = vector.load %arg4[%c0_5, %c0_6] : memref<16x8xf32, #tpu.memory_space<vmem>>, vector<16x8xf32>
    tpu.vector_store %arg4[%c0_5, %c0_6], %5 {strides = array<i32>} : memref<16x8xf32, #tpu.memory_space<vmem>>, vector<16x8xf32>,
    return
  }
  func.func @transform_0(%arg0: i32) -> (i32, i32) {
    %c0_i32 = arith.constant 0 : i32
    %c0_i32_0 = arith.constant 0 : i32
    return %c0_i32, %arg0 : i32, i32
  }
  func.func @transform_1(%arg0: i32) -> (i32, i32) {
    %c0_i32 = arith.constant 0 : i32
    %c0_i32_0 = arith.constant 0 : i32
    %c0_i32_1 = arith.constant 0 : i32
    return %c0_i32, %c0_i32_0 : i32, i32
  }
  func.func @transform_2(%arg0: i32) -> (i32, i32) {
    %c0_i32 = arith.constant 0 : i32
    %c0_i32_0 = arith.constant 0 : i32
    %c0_i32_1 = arith.constant 0 : i32
    return %c0_i32, %c0_i32_0 : i32, i32
  }
  func.func @transform_3(%arg0: i32) -> (i32, i32) {
    %c0_i32 = arith.constant 0 : i32
    %c0_i32_0 = arith.constant 0 : i32
    return %c0_i32, %arg0 : i32, i32
  }
}

</mosaic_0001>

<llo_original>
// kernel: tpu_custom_call.1
$region0: #{tpu_custom_call.1}
  #allocation0 [shape = 'u32[]', space=smem, size = 0x4, offset = 0x4, fixed_abs, tag = 'smem constant byte address 0x4 - core index']
  #allocation1 [shape = 'u32[144,128]{1,0:T(1,128)}', space=vmem, size = 0x12000, scoped, tag = 'internal scratch']
  %s0 = inlined_call_operand.vmem [shape: f32[8,8], index: 0, kind: input, shape index: {}]
  %s1 = inlined_call_operand.vmem [shape: f32[16,8], index: 1, kind: input, shape index: {}]
  %s2 = inlined_call_operand.vmem [shape: f32[16,1], index: 2, kind: input, shape index: {}]
  %s3 = inlined_call_operand.vmem [shape: f32[16,8], index: 3, kind: output, shape index: {}]
  %s4 = sld [smem:[#allocation0]]
  $region22: #{tpu_custom_call.1} parent=0
    _
  %s6 = ssub.s32 1, %s4
  %s7 = scalar_select 0, %s6, %s4
  // Predicated region
  $region2: #{tpu_custom_call.1} parent=0 // pred_check
    _
  $region3: #{tpu_custom_call.1} parent=0 // pred_check_branch
    %9 = sbr.rel (0) target = $region5
  $region4: #{tpu_custom_call.1} parent=0 // pred_region
    _
  $region5: #{tpu_custom_call.1} parent=0 // pred_fallthru
    _
  // Predicated region
  $region6: #{tpu_custom_call.1} parent=0 // pred_check
    _
  $region7: #{tpu_custom_call.1} parent=0 // pred_check_branch
    %11 = sbr.rel (0) target = $region9
  $region8: #{tpu_custom_call.1} parent=0 // pred_region
    _
  $region9: #{tpu_custom_call.1} parent=0 // pred_fallthru
    _
  // Predicated region
  $region10: #{tpu_custom_call.1} parent=0 // pred_check
    _
  $region11: #{tpu_custom_call.1} parent=0 // pred_check_branch
    %13 = sbr.rel (0) target = $region13
  $region12: #{tpu_custom_call.1} parent=0 // pred_region
    _
  $region13: #{tpu_custom_call.1} parent=0 // pred_fallthru
    _
  %v14 = vld [vmem:[%s1] sm:$0xff]
  %v15 = vld [vmem:[%s1 + $0x8] sm:$0xff]
  %v16 = vld [vmem:[%s0] sm:$0xff]
  %v17 = vld [vmem:[%s2] sm:$0xff]
  %v18 = vld [vmem:[%s2 + $0x8] sm:$0xff]
  %20 = vset.pattern.permute.xlu0 0
  %21 = vperm.xlu0 %20, %v17
  %v22 = vpop.permute.xlu0 %21
  %25 = vset.pattern.permute.xlu0 0
  %26 = vperm.xlu0 %25, %v18
  %v27 = vpop.permute.xlu0 %26
  %vm29 = vcmask 64512
  %v31 = vsel %vm29, %v14, 0
  %v34 = vsel %vm29, %v15, 0
  %36 = vmatprep.subr.mxu0 0.0
  %37 = vmatpush1.msra.mxu0 0.0
  %38 = vmatprep.subr.mxu0 0.0
  %39 = vmatpush1.msra.mxu0 0.0
  %40 = vmatprep.subr.mxu0 0.0
  %41 = vmatpush1.msra.mxu0 0.0
  %42 = vmatprep.subr.mxu0 0.0
  %43 = vmatpush1.msra.mxu0 0.0
  %44 = vmatprep.subr.mxu0 0.0
  %45 = vmatpush1.msra.mxu0 0.0
  %46 = vmatprep.subr.mxu0 0.0
  %47 = vmatpush1.msra.mxu0 0.0
  %48 = vmatprep.subr.mxu0 0.0
  %49 = vmatpush1.msra.mxu0 0.0
  %50 = vmatprep.subr.mxu0 0.0
  %51 = vmatpush1.msra.mxu0 0.0
  %52 = vmatprep.subr.mxu0 0.0
  %53 = vmatpush1.msra.mxu0 0.0
  %54 = vmatprep.subr.mxu0 0.0
  %55 = vmatpush1.msra.mxu0 0.0
  %56 = vmatprep.subr.mxu0 0.0
  %57 = vmatpush1.msra.mxu0 0.0
  %58 = vmatprep.subr.mxu0 0.0
  %59 = vmatpush1.msra.mxu0 0.0
  %60 = vmatprep.subr.mxu0 0.0
  %61 = vmatpush1.msra.mxu0 0.0
  %62 = vmatprep.subr.mxu0 0.0
  %63 = vmatpush1.msra.mxu0 0.0
  %64 = vmatprep.subr.mxu0 0.0
  %65 = vmatpush1.msra.mxu0 0.0
  %66 = vmatprep.subr.mxu0 0.0
  %67 = vmatpush1.msra.mxu0 %v16
  %68 = vmatprep.subr.mxu0 0.0
  %69 = vmatpush2.msra.mxu0 0.0
  %70 = vmatprep.subr.mxu0 0.0
  %71 = vmatpush2.msra.mxu0 0.0
  %72 = vmatprep.subr.mxu0 0.0
  %73 = vmatpush2.msra.mxu0 0.0
  %74 = vmatprep.subr.mxu0 0.0
  %75 = vmatpush2.msra.mxu0 0.0
  %76 = vmatprep.subr.mxu0 0.0
  %77 = vmatpush2.msra.mxu0 0.0
  %78 = vmatprep.subr.mxu0 0.0
  %79 = vmatpush2.msra.mxu0 0.0
  %80 = vmatprep.subr.mxu0 0.0
  %81 = vmatpush2.msra.mxu0 0.0
  %82 = vmatprep.subr.mxu0 0.0
  %83 = vmatpush2.msra.mxu0 0.0
  %84 = vmatprep.subr.mxu0 0.0
  %85 = vmatpush2.msra.mxu0 0.0
  %86 = vmatprep.subr.mxu0 0.0
  %87 = vmatpush2.msra.mxu0 0.0
  %88 = vmatprep.subr.mxu0 0.0
  %89 = vmatpush2.msra.mxu0 0.0
  %90 = vmatprep.subr.mxu0 0.0
  %91 = vmatpush2.msra.mxu0 0.0
  %92 = vmatprep.subr.mxu0 0.0
  %93 = vmatpush2.msra.mxu0 0.0
  %94 = vmatprep.subr.mxu0 0.0
  %95 = vmatpush2.msra.mxu0 0.0
  %96 = vmatprep.subr.mxu0 0.0
  %97 = vmatpush2.msra.mxu0 0.0
  %98 = vmatprep.subr.mxu0 0.0
  %99 = vmatpush2.msra.mxu0 0.0
  %100 = vmatprep.mubr.f32.mxu0 0.0
  %101 = vmatmul.mubr.f32.gmra.mxu0 %v31
  %v102 = vpop.f32.mrf.mxu0
  %v103 = vadd.f32 %v22, %v102
  %v104 = vpop.f32.mrf.mxu0
  %105 = vmatprep.mubr.f32.mxu0 0.0
  %106 = vmatmul.mubr.f32.gmra.mxu0 %v34
  %v107 = vpop.f32.mrf.mxu0
  %v108 = vadd.f32 %v27, %v107
  %v109 = vpop.f32.mrf.mxu0
  %110 = vdwg.mxu0
  %111 = vst.msk [vmem:[%s3] sm:$0xff] %vm29, %v103
  %112 = vst.msk [vmem:[%s3 + $0x8] sm:$0xff] %vm29, %v108
  // Predicated region
  $region14: #{tpu_custom_call.1} parent=0 // pred_check
    _
  $region15: #{tpu_custom_call.1} parent=0 // pred_check_branch
    %114 = sbr.rel (0) target = $region17
  $region16: #{tpu_custom_call.1} parent=0 // pred_region
    _
  $region17: #{tpu_custom_call.1} parent=0 // pred_fallthru
    _
  // Predicated region
  $region18: #{tpu_custom_call.1} parent=0 // pred_check
    _
  $region19: #{tpu_custom_call.1} parent=0 // pred_check_branch
    %116 = sbr.rel (0) target = $region21
  $region20: #{tpu_custom_call.1} parent=0 // pred_region
    _
  $region21: #{tpu_custom_call.1} parent=0 // pred_fallthru
    _

</llo_original>
